<compile_context>
chip_gen: v6e
topology: v6e:2x2x1
jax: 0.10.0
libtpu: 0.0.40
codegen_flags: <defaults>
</compile_context>

<pallas_src>
import functools

import numpy as np
import jax
import jax.numpy as jnp
from jax import lax
from jax.experimental import pallas as pl
from jax.experimental.pallas import tpu as pltpu

_VMEM_LIMIT = 64 << 20  # v5e default scoped limit is 16 MiB; raise for big tiles.


# ----------------------------------------------------------------------------
# Pass 1 (dense path): hidden += x_tile @ W.weight_tile^T, reduced over voc.
# Grid = (k_splits "parallel", steps "arbitrary"); one resident f32 partial
# accumulator per split (summed in the wrapper).
# ----------------------------------------------------------------------------
def _w_proj_kernel(x_ref, w_ref, hid_ref, *, compute_dtype):
    @pl.when(pl.program_id(1) == 0)
    def _():
        hid_ref[...] = jnp.zeros_like(hid_ref)

    hid_ref[...] += lax.dot_general(
        x_ref[...].astype(compute_dtype),
        w_ref[...].astype(compute_dtype),
        dimension_numbers=(((1,), (1,)), ((), ())),  # contract lane axes: A @ B^T
        preferred_element_type=jnp.float32,
    )


# ----------------------------------------------------------------------------
# Pass 2 (shared): out_tile = hidden @ WT.weight_tile^T for one lane-dense
# voc output tile.  hidden stays resident; WT rows stream through VMEM.
# ----------------------------------------------------------------------------
def _wt_proj_kernel(hid_ref, wt_ref, out_ref, *, compute_dtype):
    out_ref[...] = lax.dot_general(
        hid_ref[...].astype(compute_dtype),
        wt_ref[...].astype(compute_dtype),
        dimension_numbers=(((1,), (1,)), ((), ())),
        preferred_element_type=jnp.float32,
    ).astype(out_ref.dtype)


def _wt_projection(hidden, wt_weight, *, compute_dtype, tile_n, out_dtype,
                   vmem_limit=_VMEM_LIMIT):
    batch, emb = hidden.shape
    voc = wt_weight.shape[0]
    assert wt_weight.shape == (voc, emb)
    tile_n = min(tile_n, voc)
    assert voc % tile_n == 0, "voc must tile evenly by tile_n"

    return pl.pallas_call(
        functools.partial(_wt_proj_kernel, compute_dtype=compute_dtype),
        out_shape=jax.ShapeDtypeStruct((batch, voc), out_dtype),
        grid=(voc // tile_n,),
        in_specs=[
            pl.BlockSpec((batch, emb), lambda j: (0, 0)),    # hidden stays resident
            pl.BlockSpec((tile_n, emb), lambda j: (j, 0)),   # WT.weight row tile
        ],
        out_specs=pl.BlockSpec((batch, tile_n), lambda j: (0, j)),
        compiler_params=pltpu.CompilerParams(
            dimension_semantics=("parallel",), vmem_limit_bytes=vmem_limit),
        cost_estimate=pl.CostEstimate(
            flops=2 * batch * voc * emb,
            transcendentals=0,
            bytes_accessed=batch * emb * hidden.dtype.itemsize
            + voc * emb * wt_weight.dtype.itemsize
            + batch * voc * np.dtype(out_dtype).itemsize,
        ),
    )(hidden, wt_weight)


# ----------------------------------------------------------------------------
# Dense path (exact module semantics: x is an arbitrary [B, voc] activation).
# ----------------------------------------------------------------------------
def word2vec_forward(x, w_weight, wt_weight, *, compute_dtype=jnp.float32,
                     tile_k=512, tile_n=512, k_splits=2, out_dtype=None,
                     vmem_limit=_VMEM_LIMIT):
    """x: [B, voc]; w_weight: [emb, voc]; wt_weight: [voc, emb] (PyTorch layout).

    For best bandwidth store w_weight / wt_weight in `compute_dtype` in HBM
    (cast once at init); the in-kernel cast is then a no-op.
    """
    batch, voc = x.shape
    emb = w_weight.shape[0]
    assert w_weight.shape == (emb, voc) and wt_weight.shape == (voc, emb)
    out_dtype = x.dtype if out_dtype is None else out_dtype

    tile_k = min(tile_k, voc)
    tile_n = min(tile_n, voc)
    assert voc % tile_k == 0 and voc % tile_n == 0, "voc must tile evenly"
    if voc % (k_splits * tile_k) != 0:
        k_splits = 1                      # fall back: single reduction stream
    steps = voc // (k_splits * tile_k)    # reduction steps per split

    # Pass 1: partial hidden accumulators, one per voc split (v7x: both TCs
    # drive the HBM stream via the leading "parallel" axis).
    partials = pl.pallas_call(
        functools.partial(_w_proj_kernel, compute_dtype=compute_dtype),
        out_shape=jax.ShapeDtypeStruct((k_splits, batch, emb), jnp.float32),
        grid=(k_splits, steps),
        in_specs=[
            pl.BlockSpec((batch, tile_k), lambda p, k: (0, p * steps + k)),
            pl.BlockSpec((emb, tile_k), lambda p, k: (0, p * steps + k)),
        ],
        out_specs=pl.BlockSpec((None, batch, emb), lambda p, k: (p, 0, 0)),
        compiler_params=pltpu.CompilerParams(
            dimension_semantics=("parallel", "arbitrary"),
            vmem_limit_bytes=vmem_limit),
        cost_estimate=pl.CostEstimate(
            flops=2 * batch * voc * emb,
            transcendentals=0,
            bytes_accessed=batch * voc * x.dtype.itemsize
            + emb * voc * w_weight.dtype.itemsize
            + k_splits * batch * emb * 4,
        ),
    )(x, w_weight)
    hidden = jnp.sum(partials, axis=0)    # tiny [k_splits, B, emb] reduction

    # Pass 2: out[B, voc] = hidden @ WT.weight.T, streamed over voc tiles.
    return _wt_projection(hidden, wt_weight, compute_dtype=compute_dtype,
                          tile_n=tile_n, out_dtype=out_dtype,
                          vmem_limit=vmem_limit)


# ----------------------------------------------------------------------------
# Skip-gram fast path: x is one-hot, so matmul #1 is just a row gather of
# W.weight.T.  The gather now runs ONCE (grid of size 1) in its own tiny
# kernel; the table stays in HBM (memory_space=pl.ANY) and the B rows are
# DMA'd straight into VMEM using the scalar-prefetched indices.
# ----------------------------------------------------------------------------
def _gather_rows_kernel(idx_ref, table_ref, out_ref, hid_buf, sems):
    batch = out_ref.shape[0]
    for b in range(batch):
        pltpu.make_async_copy(
            table_ref.at[pl.ds(idx_ref[b], 1)], hid_buf.at[pl.ds(b, 1)], sems.at[b]
        ).start()
    for b in range(batch):
        pltpu.make_async_copy(
            table_ref.at[pl.ds(idx_ref[b], 1)], hid_buf.at[pl.ds(b, 1)], sems.at[b]
        ).wait()
    out_ref[...] = hid_buf[...].astype(out_ref.dtype)


def word2vec_forward_onehot(idx, emb_table, wt_weight, *, compute_dtype=jnp.float32,
                            tile_n=512, out_dtype=jnp.float32,
                            vmem_limit=_VMEM_LIMIT):
    """idx: [B] int32; emb_table: [voc, emb] (= W.weight.T, pre-transposed ONCE at
    init, ideally already in compute_dtype); wt_weight: [voc, emb] (PyTorch layout).
    Equivalent to forward(one_hot(idx)); output dtype fixed (default f32) so the
    dense and fast paths agree regardless of the table's storage dtype."""
    voc, emb = emb_table.shape
    assert wt_weight.shape == (voc, emb)
    batch = idx.shape[0]
    itemsize = emb_table.dtype.itemsize

    gather_spec = pltpu.PrefetchScalarGridSpec(
        num_scalar_prefetch=1,                       # idx lands in SMEM
        grid=(1,),                                   # gather happens exactly once
        in_specs=[pl.BlockSpec(memory_space=pl.ANY)],  # table stays in HBM
        out_specs=pl.BlockSpec((batch, emb), lambda i, idx_ref: (0, 0)),
        scratch_shapes=[
            pltpu.VMEM((batch, emb), emb_table.dtype),
            pltpu.SemaphoreType.DMA((batch,)),
        ],
    )
    hidden = pl.pallas_call(
        _gather_rows_kernel,
        out_shape=jax.ShapeDtypeStruct((batch, emb), emb_table.dtype),
        grid_spec=gather_spec,
        compiler_params=pltpu.CompilerParams(
            dimension_semantics=("arbitrary",), vmem_limit_bytes=vmem_limit),
        cost_estimate=pl.CostEstimate(
            flops=0, transcendentals=0,
            bytes_accessed=2 * batch * emb * itemsize + batch * 4),
    )(idx.astype(jnp.int32), emb_table)

    return _wt_projection(hidden, wt_weight, compute_dtype=compute_dtype,
                          tile_n=tile_n, out_dtype=out_dtype,
                          vmem_limit=vmem_limit)


if __name__ == "__main__":
    # Small but MXU/lane-aligned shapes implied by the module.
    # (For real training, batch >= 128 per call is recommended -- at B=8 the
    #  kernels are purely HBM-streaming-bound.)
    batch = 8
    voc_size = 2048
    embedding_size = 128

    key = jax.random.PRNGKey(0)
    kx, kw, kwt = jax.random.split(key, 3)

    # PyTorch nn.Linear weight layout [out_features, in_features].
    w_weight = jax.random.normal(kw, (embedding_size, voc_size), jnp.float32) * 0.1
    wt_weight = jax.random.normal(kwt, (voc_size, embedding_size), jnp.float32) * 0.1

    # Skip-gram input: one-hot rows over the vocabulary.
    idx = jax.random.randint(kx, (batch,), 0, voc_size)
    x = jax.nn.one_hot(idx, voc_size, dtype=jnp.float32)

    # High-precision reference.
    ref = jnp.dot(jnp.dot(x, w_weight.T, precision="highest"),
                  wt_weight.T, precision="highest")

    # (1) Dense path, exact module semantics, f32 weights in HBM.
    out = jax.block_until_ready(word2vec_forward(x, w_weight, wt_weight))
    assert out.shape == (batch, voc_size)
    assert jnp.allclose(out, ref, atol=1e-4, rtol=1e-4)

    # (2) Skip-gram fast path: one-hot matmul replaced by a single HBM row gather.
    emb_table = jnp.asarray(w_weight.T)  # pre-transposed ONCE at init, [voc, emb]
    out_fast = jax.block_until_ready(word2vec_forward_onehot(idx, emb_table, wt_weight))
    assert jnp.allclose(out_fast, ref, atol=1e-4, rtol=1e-4)

    # (3) bf16 weights stored ONCE in HBM (halves streamed bytes), bf16 MXU
    #     operands with f32 accumulation (looser tolerance).
    w_bf16 = w_weight.astype(jnp.bfloat16)
    wt_bf16 = wt_weight.astype(jnp.bfloat16)
    out_bf16 = jax.block_until_ready(
        word2vec_forward(x, w_bf16, wt_bf16, compute_dtype=jnp.bfloat16))
    assert jnp.allclose(out_bf16, ref, atol=5e-2, rtol=5e-2)

    # (4) bf16 fast path (bf16 embedding table + WT weights in HBM, f32 output).
    emb_table_bf16 = jnp.asarray(w_bf16.T)
    out_fast_bf16 = jax.block_until_ready(
        word2vec_forward_onehot(idx, emb_table_bf16, wt_bf16,
                                compute_dtype=jnp.bfloat16))
    assert jnp.allclose(out_fast_bf16, ref, atol=5e-2, rtol=5e-2)

    print("KERNEL_OK")
</pallas_src>

<mosaic_0001>
module attributes {stable_mosaic.version = 11 : i64} {
  func.func @_w_proj_kernel(%arg0: i32, %arg1: i32, %arg2: memref<8x512xf32, #tpu.memory_space<vmem>>, %arg3: memref<128x512xf32, #tpu.memory_space<vmem>>, %arg4: memref<1x8x128xf32, #tpu.memory_space<vmem>>) attributes {dimension_semantics = [#tpu.dimension_semantics<parallel>, #tpu.dimension_semantics<arbitrary>], iteration_bounds = array<i64: 2, 2>, scalar_prefetch = 0 : i64, scratch_operands = 0 : i64, tpu.core_type = #tpu.core_type<tc>, window_params = [{transform_indices = @transform_0, window_bounds = array<i64: 8, 512>}, {transform_indices = @transform_1, window_bounds = array<i64: 128, 512>}, {transform_indices = @transform_2, window_bounds = array<i64: 1, 8, 128>}]} {
    %c0_i32 = arith.constant 0 : i32
    %0 = arith.cmpi eq, %arg1, %c0_i32 : i32
    %1 = arith.extui %0 : i1 to i32
    %c0_i32_0 = arith.constant 0 : i32
    %2 = arith.cmpi ne, %1, %c0_i32_0 : i32
    scf.if %2 {
      %cst_10 = arith.constant 0.000000e+00 : f32
      %12 = vector.broadcast %cst_10 : f32 to vector<8x128xf32>
      %c0_11 = arith.constant 0 : index
      %c0_12 = arith.constant 0 : index
      %c0_13 = arith.constant 0 : index
      %13 = vector.load %arg4[%c0_11, %c0_12, %c0_13] : memref<1x8x128xf32, #tpu.memory_space<vmem>>, vector<1x8x128xf32>
      %14 = vector.shape_cast %13 : vector<1x8x128xf32> to vector<8x128xf32>
      %15 = vector.shape_cast %12 : vector<8x128xf32> to vector<1x8x128xf32>
      tpu.vector_store %arg4[%c0_11, %c0_12, %c0_13], %15 {strides = array<i32>} : memref<1x8x128xf32, #tpu.memory_space<vmem>>, vector<1x8x128xf32>,
    } else {
    }
    %c0 = arith.constant 0 : index
    %c0_1 = arith.constant 0 : index
    %c0_2 = arith.constant 0 : index
    %3 = vector.load %arg4[%c0, %c0_1, %c0_2] : memref<1x8x128xf32, #tpu.memory_space<vmem>>, vector<1x8x128xf32>
    %4 = vector.shape_cast %3 : vector<1x8x128xf32> to vector<8x128xf32>
    %c0_3 = arith.constant 0 : index
    %c0_4 = arith.constant 0 : index
    %5 = vector.load %arg2[%c0_3, %c0_4] : memref<8x512xf32, #tpu.memory_space<vmem>>, vector<8x512xf32>
    %c0_5 = arith.constant 0 : index
    %c0_6 = arith.constant 0 : index
    %6 = vector.load %arg3[%c0_5, %c0_6] : memref<128x512xf32, #tpu.memory_space<vmem>>, vector<128x512xf32>
    %cst = arith.constant dense<0.000000e+00> : vector<8x128xf32>
    %7 = tpu.matmul %5, %6, %cst {dimension_numbers = #tpu.dot_dimension_numbers<[1], [1], [0], [0], [0, 0, 1, 0], [], []>} : vector<8x512xf32>, vector<128x512xf32>, vector<8x128xf32> -> vector<8x128xf32>
    %8 = arith.addf %4, %7 : vector<8x128xf32>
    %c0_7 = arith.constant 0 : index
    %c0_8 = arith.constant 0 : index
    %c0_9 = arith.constant 0 : index
    %9 = vector.load %arg4[%c0_7, %c0_8, %c0_9] : memref<1x8x128xf32, #tpu.memory_space<vmem>>, vector<1x8x128xf32>
    %10 = vector.shape_cast %9 : vector<1x8x128xf32> to vector<8x128xf32>
    %11 = vector.shape_cast %8 : vector<8x128xf32> to vector<1x8x128xf32>
    tpu.vector_store %arg4[%c0_7, %c0_8, %c0_9], %11 {strides = array<i32>} : memref<1x8x128xf32, #tpu.memory_space<vmem>>, vector<1x8x128xf32>,
    return
  }
  func.func @transform_0(%arg0: i32, %arg1: i32) -> (i32, i32) {
    %c2_i32 = arith.constant 2 : i32
    %0 = arith.muli %arg0, %c2_i32 : i32
    %1 = arith.addi %0, %arg1 : i32
    %c0_i32 = arith.constant 0 : i32
    %c0_i32_0 = arith.constant 0 : i32
    return %c0_i32, %1 : i32, i32
  }
  func.func @transform_1(%arg0: i32, %arg1: i32) -> (i32, i32) {
    %c2_i32 = arith.constant 2 : i32
    %0 = arith.muli %arg0, %c2_i32 : i32
    %1 = arith.addi %0, %arg1 : i32
    %c0_i32 = arith.constant 0 : i32
    %c0_i32_0 = arith.constant 0 : i32
    return %c0_i32, %1 : i32, i32
  }
  func.func @transform_2(%arg0: i32, %arg1: i32) -> (i32, i32, i32) {
    %c0_i32 = arith.constant 0 : i32
    %c0_i32_0 = arith.constant 0 : i32
    %c0_i32_1 = arith.constant 0 : i32
    return %arg0, %c0_i32, %c0_i32_0 : i32, i32, i32
  }
}

</mosaic_0001>

<llo_original>
// kernel: tpu_custom_call.1
$region0: #{tpu_custom_call.1}
  #allocation0 [shape = 'u32[]', space=smem, size = 0x4, offset = 0x4, fixed_abs, tag = 'smem constant byte address 0x4 - core index']
  #allocation1 [shape = 'u32[144,128]{1,0:T(1,128)}', space=vmem, size = 0x12000, scoped, tag = 'internal scratch']
  %s0 = inlined_call_operand.hbm [shape: f32[8,2048], index: 0, kind: input, shape index: {}]
  %s1 = inlined_call_operand.hbm [shape: f32[128,2048], index: 1, kind: input, shape index: {}]
  %s2 = inlined_call_operand.hbm [shape: f32[2,8,128], index: 2, kind: output, shape index: {}]
  %s3 = sld [smem:[#allocation0]]
  $region53: #{tpu_custom_call.1} parent=0
    _
  %s5 = ssub.s32 1, %s3
  %s6 = scalar_select 0, %s5, %s3
  $region1: #{tpu_custom_call.1} parent=0
    #allocation2 [shape = 'u8[32768]{0}', space=vmem, size = 0x8000, scoped, tag = 'input window, operand 0']
    #allocation3 [shape = 's32[2]{0}', space=sflag, size = 0x8, scoped, tag = 'scoped memory for tpu_custom_call.1']
    #allocation4 [shape = 's32[2]{0}', space=sflag, size = 0x8, scoped, tag = 'scoped memory for tpu_custom_call.1']
    #allocation5 [shape = 'u8[524288]{0}', space=vmem, size = 0x80000, scoped, tag = 'input window, operand 1']
    #allocation6 [shape = 's32[2]{0}', space=sflag, size = 0x8, scoped, tag = 'scoped memory for tpu_custom_call.1']
    #allocation7 [shape = 'u8[8192]{0}', space=vmem, size = 0x2000, scoped, tag = 'output window, operand 0']
    %7 = vsyncpa [#allocation3], 0
    %s8 = scalar_lea.sflag [#allocation3], 1
    %9 = vsyncpa %s8, 0
    %10 = vsyncpa [#allocation6], 0
    %s11 = scalar_lea.sflag [#allocation6], 1
    %12 = vsyncpa %s11, 0
    %13 = vsyncpa [#allocation4], 0
    %s14 = scalar_lea.sflag [#allocation4], 1
    %15 = vsyncpa %s14, 0
    loop: start=0, step=1, limit=6
    $region2: #{tpu_custom_call.1} parent=1 // loop_pre_header
      _
    $region3: #{tpu_custom_call.1} parent=1 // loop_header
      %s17 = sphi 0, %s21
      %p18 = scmp.ge.s32.totalorder %s17, 6
      %s24 = sphi 0, %s36
      %s25 = sphi 0, %s32
      %s26 = sphi 0, %s24
      %s27 = sphi 0, %s25
      %s28 = sphi 0, %s26
      %s29 = sphi 0, %s27
      %s43 = sphi 0, %s45
      %s46 = sphi 0, %s43
      %s47 = sphi 0, %s46
      %s63 = sphi 0, %s47
      %s73 = sphi 0, %s75
      %s76 = sphi 0, %s73
      %s77 = sphi 0, %s76
      %s93 = sphi 0, %s77
      %s99 = sphi 0, %s101
      %s102 = sphi 0, %s99
      %s103 = sphi 0, %s102
      %s119 = sphi 0, %s103
    $region4: #{tpu_custom_call.1} parent=1 // loop_header_branch
      %20 = sbr.rel (%p18) target = $region8
    $region5: #{tpu_custom_call.1} parent=1 // loop_body
      %s22 = ssub.s32 %s17, 1
      %s23 = ssub.s32 %s17, 2
      %s30 = sadd.s32 1, %s25
      %p31 = scmp.ge.s32.totalorder %s30, 2
      %s32 = scalar_select %p31, 0, %s30
      %s33 = sadd.s32 1, %s24
      %s34 = scalar_select %p31, %s33, %s24
      %p35 = scmp.ge.s32.totalorder %s34, 2
      %s36 = scalar_select %p35, 0, %s34
      %s37 = smul.u32 %s24, 2
      %s38 = sadd.s32 %s37, %s25
      %s39 = smul.u32 %s36, 2
      %s40 = sadd.s32 %s39, %s32
      %s41 = ssub.s32 %s38, %s40
      %p42 = scmp.eq.s32.totalorder %s41, 0
      %s44 = sadd.s32 %s43, 1
      %s45 = scalar_select %p42, %s43, %s44
      %p48 = pneg %p42
      %p49 = scmp.eq.s32.totalorder %s17, 3
      %p50 = por %p48, %p49
      %p51 = scmp.ne.s32.totalorder %s43, %s46
      %p52 = scmp.eq.s32.totalorder %s17, 0
      %p53 = por %p51, %p52
      %p54 = scmp.ne.s32.totalorder %s43, %s46
      %p55 = scmp.eq.s32.totalorder %s22, 3
      %p56 = por %p54, %p55
      %p57 = scmp.ne.s32.totalorder %s46, %s47
      %p58 = scmp.eq.s32.totalorder %s22, 0
      %p59 = por %p57, %p58
      %p60 = scmp.ne.s32.totalorder %s46, %s47
      %p61 = scmp.eq.s32.totalorder %s23, 3
      %p62 = por %p60, %p61
      %p64 = scmp.ne.s32.totalorder %s47, %s63
      %p65 = scmp.eq.s32.totalorder %s23, 0
      %p66 = por %p64, %p65
      %s67 = smul.u32 %s24, 2
      %s68 = sadd.s32 %s67, %s25
      %s69 = smul.u32 %s36, 2
      %s70 = sadd.s32 %s69, %s32
      %s71 = ssub.s32 %s68, %s70
      %p72 = scmp.eq.s32.totalorder %s71, 0
      %s74 = sadd.s32 %s73, 1
      %s75 = scalar_select %p72, %s73, %s74
      %p78 = pneg %p72
      %p79 = scmp.eq.s32.totalorder %s17, 3
      %p80 = por %p78, %p79
      %p81 = scmp.ne.s32.totalorder %s73, %s76
      %p82 = scmp.eq.s32.totalorder %s17, 0
      %p83 = por %p81, %p82
      %p84 = scmp.ne.s32.totalorder %s73, %s76
      %p85 = scmp.eq.s32.totalorder %s22, 3
      %p86 = por %p84, %p85
      %p87 = scmp.ne.s32.totalorder %s76, %s77
      %p88 = scmp.eq.s32.totalorder %s22, 0
      %p89 = por %p87, %p88
      %p90 = scmp.ne.s32.totalorder %s76, %s77
      %p91 = scmp.eq.s32.totalorder %s23, 3
      %p92 = por %p90, %p91
      %p94 = scmp.ne.s32.totalorder %s77, %s93
      %p95 = scmp.eq.s32.totalorder %s23, 0
      %p96 = por %p94, %p95
      %s97 = ssub.s32 %s24, %s36
      %p98 = scmp.eq.s32.totalorder %s97, 0
      %s100 = sadd.s32 %s99, 1
      %s101 = scalar_select %p98, %s99, %s100
      %p104 = pneg %p98
      %p105 = scmp.eq.s32.totalorder %s17, 3
      %p106 = por %p104, %p105
      %p107 = scmp.ne.s32.totalorder %s99, %s102
      %p108 = scmp.eq.s32.totalorder %s17, 0
      %p109 = por %p107, %p108
      %p110 = scmp.ne.s32.totalorder %s99, %s102
      %p111 = scmp.eq.s32.totalorder %s22, 3
      %p112 = por %p110, %p111
      %p113 = scmp.ne.s32.totalorder %s102, %s103
      %p114 = scmp.eq.s32.totalorder %s22, 0
      %p115 = por %p113, %p114
      %p116 = scmp.ne.s32.totalorder %s102, %s103
      %p117 = scmp.eq.s32.totalorder %s23, 3
      %p118 = por %p116, %p117
      %p120 = scmp.ne.s32.totalorder %s103, %s119
      %p121 = scmp.eq.s32.totalorder %s23, 0
      %p122 = por %p120, %p121
      %p123 = scmp.le.s32.totalorder 1, %s17
      %p124 = scmp.lt.s32.totalorder %s17, 5
      %p125 = pnand %p123, %p124
      %p126 = pneg %p125
      // Predicated region
      $region9: #{tpu_custom_call.1} parent=5 // pred_check
        _
      $region10: #{tpu_custom_call.1} parent=5 // pred_check_branch
        %128 = sbr.rel (%p125) target = $region12
      $region11: #{tpu_custom_call.1} parent=5 // pred_region
        %s129 = ssub.s32 %s17, 1
      $region12: #{tpu_custom_call.1} parent=5 // pred_fallthru
        _
      %p130 = scmp.lt.s32.totalorder %s17, 4
      // Predicated region
      $region13: #{tpu_custom_call.1} parent=5 // pred_check
        %p131 = pneg %p130
      $region14: #{tpu_custom_call.1} parent=5 // pred_check_branch
        %133 = sbr.rel (%p131) target = $region16
      $region15: #{tpu_custom_call.1} parent=5 // pred_region
        // Predicated region
        $region17: #{tpu_custom_call.1} parent=15 // pred_check
          %p134 = pneg %p53
        $region18: #{tpu_custom_call.1} parent=15 // pred_check_branch
          %136 = sbr.rel (%p134) target = $region20
        $region19: #{tpu_custom_call.1} parent=15 // pred_region
          %s137 = sand.u32 %s43, 1
          %s138 = scalar_lea.sflag [#allocation3], %s137
          %s139 = sand.u32 %s43, 1
          %s140 = smul.addr %s139, 32
          %s141 = scalar_lea.vmem [#allocation2], %s140
          %s142 = smul.u32 %s24, 2
          %s143 = sadd.s32 %s142, %s25
          %s144 = smul.u32 4, %s143
          %s146 = ssub.s32 512, 512
          %147 = vsyncadd %s138, %s146
          %s148 = smul.addr %s144, 128
          %s149 = scalar_lea.hbm %s0, %s148
          %s151 = sshll.u32 %s141, 4
          %s152 = int_to_ptr.vmem [resolvable:$true] %s151
          %154 = dma.hbm_to_vmem [thread:$0]  %s149, 512, %s152, %s138
        $region20: #{tpu_custom_call.1} parent=15 // pred_fallthru
          _
        // Predicated region
        $region21: #{tpu_custom_call.1} parent=15 // pred_check
          %p155 = pneg %p83
        $region22: #{tpu_custom_call.1} parent=15 // pred_check_branch
          %157 = sbr.rel (%p155) target = $region24
        $region23: #{tpu_custom_call.1} parent=15 // pred_region
          %s158 = sand.u32 %s73, 1
          %s159 = scalar_lea.sflag [#allocation6], %s158
          %s160 = sand.u32 %s73, 1
          %s161 = smul.addr %s160, 512
          %s162 = scalar_lea.vmem [#allocation5], %s161
          %s163 = smul.u32 %s24, 2
          %s164 = sadd.s32 %s163, %s25
          %s165 = smul.u32 4, %s164
          %s167 = ssub.s32 8192, 8192
          %168 = vsyncadd %s159, %s167
          %s169 = smul.addr %s165, 128
          %s170 = scalar_lea.hbm %s1, %s169
          %s171 = sshll.u32 %s162, 4
          %s172 = int_to_ptr.vmem [resolvable:$true] %s171
          %177 = dma.hbm_to_vmem [thread:$0]  %s170, 8192, %s172, %s159, 2048, 512, 32
        $region24: #{tpu_custom_call.1} parent=15 // pred_fallthru
          _
      $region16: #{tpu_custom_call.1} parent=5 // pred_fallthru
        _
      %p178 = scmp.le.s32.totalorder 1, %s17
      %p179 = scmp.lt.s32.totalorder %s17, 5
      %p180 = pnand %p178, %p179
      %p181 = pneg %p180
      // Predicated region
      $region25: #{tpu_custom_call.1} parent=5 // pred_check
        _
      $region26: #{tpu_custom_call.1} parent=5 // pred_check_branch
        %183 = sbr.rel (%p180) target = $region28
      $region27: #{tpu_custom_call.1} parent=5 // pred_region
        %s184 = ssub.s32 %s17, 1
        %s185 = sand.u32 %s46, 1
        %s186 = scalar_lea.sflag [#allocation3], %s185
        %s187 = sand.u32 %s46, 1
        %s188 = smul.addr %s187, 32
        %s189 = scalar_lea.vmem [#allocation2], %s188
        // Predicated region
        $region29: #{tpu_custom_call.1} parent=27 // pred_check
          %p190 = pneg %p59
        $region30: #{tpu_custom_call.1} parent=27 // pred_check_branch
          %192 = sbr.rel (%p190) target = $region32
        $region31: #{tpu_custom_call.1} parent=27 // pred_region
          %193 = dma.done %s186, 512
        $region32: #{tpu_custom_call.1} parent=27 // pred_fallthru
          _
        %s194 = sand.u32 %s76, 1
        %s195 = scalar_lea.sflag [#allocation6], %s194
        %s196 = sand.u32 %s76, 1
        %s197 = smul.addr %s196, 512
        %s198 = scalar_lea.vmem [#allocation5], %s197
        // Predicated region
        $region33: #{tpu_custom_call.1} parent=27 // pred_check
          %p199 = pneg %p89
        $region34: #{tpu_custom_call.1} parent=27 // pred_check_branch
          %201 = sbr.rel (%p199) target = $region36
        $region35: #{tpu_custom_call.1} parent=27 // pred_region
          %202 = dma.done %s195, 8192
        $region36: #{tpu_custom_call.1} parent=27 // pred_fallthru
          _
        %s203 = sand.u32 %s46, 1
        %s204 = scalar_lea.sflag [#allocation3], %s203
        %s205 = sand.u32 %s46, 1
        %s206 = smul.addr %s205, 32
        %s207 = scalar_lea.vmem [#allocation2], %s206
        %p208 = pneg %p59
        %p209 = pneg %p56
        %s210 = sand.u32 %s76, 1
        %s211 = scalar_lea.sflag [#allocation6], %s210
        %s212 = sand.u32 %s76, 1
        %s213 = smul.addr %s212, 512
        %s214 = scalar_lea.vmem [#allocation5], %s213
        %p215 = pneg %p89
        %p216 = pneg %p86
        %p217 = pneg %p115
        %p218 = pneg %p112
        %s219 = sand.u32 %s102, 1
        %s220 = scalar_lea.sflag [#allocation4], %s219
        %s221 = sand.u32 %s102, 1
        %s222 = smul.addr %s221, 8
        %s223 = scalar_lea.vmem [#allocation7], %s222
        %s224 = smul.u32 %s26, 2
        %s225 = sadd.s32 %s224, %s27
        %s226 = smul.u32 4, %s225
        %s227 = smul.u32 %s26, 2
        %s228 = sadd.s32 %s227, %s27
        %s229 = smul.u32 4, %s228
        %p230 = scmp.eq.s32.totalorder %s27, 0
        // Predicated region
        $region37: #{tpu_custom_call.1} parent=27 // pred_check
          %p231 = pneg %p230
        $region38: #{tpu_custom_call.1} parent=27 // pred_check_branch
          %233 = sbr.rel (%p231) target = $region40
        $region39: #{tpu_custom_call.1} parent=27 // pred_region
          %234 = vst [vmem:[%s223] sm:$0xff] 0.0
        $region40: #{tpu_custom_call.1} parent=27 // pred_fallthru
          _
        %v235 = vld [vmem:[%s223] sm:$0xff]
        %v236 = vld [vmem:[%s189] sm:$0xff]
        %v237 = vld [vmem:[%s189 + $0x8] sm:$0xff]
        %v238 = vld [vmem:[%s189 + $0x10] sm:$0xff]
        %v239 = vld [vmem:[%s189 + $0x18] sm:$0xff]
        %v240 = vld [vmem:[%s198] sm:$0xff]
        %v241 = vld [vmem:[%s198 + $0x8] sm:$0xff]
        %v242 = vld [vmem:[%s198 + $0x10] sm:$0xff]
        %v243 = vld [vmem:[%s198 + $0x18] sm:$0xff]
        %v244 = vld [vmem:[%s198 + $0x20] sm:$0xff]
        %v245 = vld [vmem:[%s198 + $0x28] sm:$0xff]
        %v246 = vld [vmem:[%s198 + $0x30] sm:$0xff]
        %v247 = vld [vmem:[%s198 + $0x38] sm:$0xff]
        %v248 = vld [vmem:[%s198 + $0x40] sm:$0xff]
        %v249 = vld [vmem:[%s198 + $0x48] sm:$0xff]
        %v250 = vld [vmem:[%s198 + $0x50] sm:$0xff]
        %v251 = vld [vmem:[%s198 + $0x58] sm:$0xff]
        %v252 = vld [vmem:[%s198 + $0x60] sm:$0xff]
        %v253 = vld [vmem:[%s198 + $0x68] sm:$0xff]
        %v254 = vld [vmem:[%s198 + $0x70] sm:$0xff]
        %v255 = vld [vmem:[%s198 + $0x78] sm:$0xff]
        %v256 = vld [vmem:[%s198 + $0x80] sm:$0xff]
        %v257 = vld [vmem:[%s198 + $0x88] sm:$0xff]
        %v258 = vld [vmem:[%s198 + $0x90] sm:$0xff]
        %v259 = vld [vmem:[%s198 + $0x98] sm:$0xff]
        %v260 = vld [vmem:[%s198 + $0xa0] sm:$0xff]
        %v261 = vld [vmem:[%s198 + $0xa8] sm:$0xff]
        %v262 = vld [vmem:[%s198 + $0xb0] sm:$0xff]
        %v263 = vld [vmem:[%s198 + $0xb8] sm:$0xff]
        %v264 = vld [vmem:[%s198 + $0xc0] sm:$0xff]
        %v265 = vld [vmem:[%s198 + $0xc8] sm:$0xff]
        %v266 = vld [vmem:[%s198 + $0xd0] sm:$0xff]
        %v267 = vld [vmem:[%s198 + $0xd8] sm:$0xff]
        %v268 = vld [vmem:[%s198 + $0xe0] sm:$0xff]
        %v269 = vld [vmem:[%s198 + $0xe8] sm:$0xff]
        %v270 = vld [vmem:[%s198 + $0xf0] sm:$0xff]
        %v271 = vld [vmem:[%s198 + $0xf8] sm:$0xff]
        %v272 = vld [vmem:[%s198 + $0x100] sm:$0xff]
        %v273 = vld [vmem:[%s198 + $0x108] sm:$0xff]
        %v274 = vld [vmem:[%s198 + $0x110] sm:$0xff]
        %v275 = vld [vmem:[%s198 + $0x118] sm:$0xff]
        %v276 = vld [vmem:[%s198 + $0x120] sm:$0xff]
        %v277 = vld [vmem:[%s198 + $0x128] sm:$0xff]
        %v278 = vld [vmem:[%s198 + $0x130] sm:$0xff]
        %v279 = vld [vmem:[%s198 + $0x138] sm:$0xff]
        %v280 = vld [vmem:[%s198 + $0x140] sm:$0xff]
        %v281 = vld [vmem:[%s198 + $0x148] sm:$0xff]
        %v282 = vld [vmem:[%s198 + $0x150] sm:$0xff]
        %v283 = vld [vmem:[%s198 + $0x158] sm:$0xff]
        %v284 = vld [vmem:[%s198 + $0x160] sm:$0xff]
        %v285 = vld [vmem:[%s198 + $0x168] sm:$0xff]
        %v286 = vld [vmem:[%s198 + $0x170] sm:$0xff]
        %v287 = vld [vmem:[%s198 + $0x178] sm:$0xff]
        %v288 = vld [vmem:[%s198 + $0x180] sm:$0xff]
        %v289 = vld [vmem:[%s198 + $0x188] sm:$0xff]
        %v290 = vld [vmem:[%s198 + $0x190] sm:$0xff]
        %v291 = vld [vmem:[%s198 + $0x198] sm:$0xff]
        %v292 = vld [vmem:[%s198 + $0x1a0] sm:$0xff]
        %v293 = vld [vmem:[%s198 + $0x1a8] sm:$0xff]
        %v294 = vld [vmem:[%s198 + $0x1b0] sm:$0xff]
        %v295 = vld [vmem:[%s198 + $0x1b8] sm:$0xff]
        %v296 = vld [vmem:[%s198 + $0x1c0] sm:$0xff]
        %v297 = vld [vmem:[%s198 + $0x1c8] sm:$0xff]
        %v298 = vld [vmem:[%s198 + $0x1d0] sm:$0xff]
        %v299 = vld [vmem:[%s198 + $0x1d8] sm:$0xff]
        %v300 = vld [vmem:[%s198 + $0x1e0] sm:$0xff]
        %v301 = vld [vmem:[%s198 + $0x1e8] sm:$0xff]
        %v302 = vld [vmem:[%s198 + $0x1f0] sm:$0xff]
        %v303 = vld [vmem:[%s198 + $0x1f8] sm:$0xff]
        %304 = vmatprep.subr.mxu0 %v301
        %305 = vmatpush1.xpose.msra.mxu0 %v300
        %306 = vmatprep.subr.mxu0 %v297
        %307 = vmatpush1.xpose.msra.mxu0 %v296
        %308 = vmatprep.subr.mxu0 %v293
        %309 = vmatpush1.xpose.msra.mxu0 %v292
        %310 = vmatprep.subr.mxu0 %v289
        %311 = vmatpush1.xpose.msra.mxu0 %v288
        %312 = vmatprep.subr.mxu0 %v285
        %313 = vmatpush1.xpose.msra.mxu0 %v284
        %314 = vmatprep.subr.mxu0 %v281
        %315 = vmatpush1.xpose.msra.mxu0 %v280
        %316 = vmatprep.subr.mxu0 %v277
        %317 = vmatpush1.xpose.msra.mxu0 %v276
        %318 = vmatprep.subr.mxu0 %v273
        %319 = vmatpush1.xpose.msra.mxu0 %v272
        %320 = vmatprep.subr.mxu0 %v269
        %321 = vmatpush1.xpose.msra.mxu0 %v268
        %322 = vmatprep.subr.mxu0 %v265
        %323 = vmatpush1.xpose.msra.mxu0 %v264
        %324 = vmatprep.subr.mxu0 %v261
        %325 = vmatpush1.xpose.msra.mxu0 %v260
        %326 = vmatprep.subr.mxu0 %v257
        %327 = vmatpush1.xpose.msra.mxu0 %v256
        %328 = vmatprep.subr.mxu0 %v253
        %329 = vmatpush1.xpose.msra.mxu0 %v252
        %330 = vmatprep.subr.mxu0 %v249
        %331 = vmatpush1.xpose.msra.mxu0 %v248
        %332 = vmatprep.subr.mxu0 %v245
        %333 = vmatpush1.xpose.msra.mxu0 %v244
        %334 = vmatprep.subr.mxu0 %v241
        %335 = vmatpush1.xpose.msra.mxu0 %v240
        %336 = vmatprep.subr.mxu0 0.0
        %337 = vmatpush2.xpose.msra.mxu0 0.0
        %338 = vmatprep.subr.mxu0 0.0
        %339 = vmatpush2.xpose.msra.mxu0 0.0
        %340 = vmatprep.subr.mxu0 0.0
        %341 = vmatpush2.xpose.msra.mxu0 0.0
        %342 = vmatprep.subr.mxu0 0.0
        %343 = vmatpush2.xpose.msra.mxu0 0.0
        %344 = vmatprep.subr.mxu0 0.0
        %345 = vmatpush2.xpose.msra.mxu0 0.0
        %346 = vmatprep.subr.mxu0 0.0
        %347 = vmatpush2.xpose.msra.mxu0 0.0
        %348 = vmatprep.subr.mxu0 0.0
        %349 = vmatpush2.xpose.msra.mxu0 0.0
        %350 = vmatprep.subr.mxu0 0.0
        %351 = vmatpush2.xpose.msra.mxu0 0.0
        %352 = vmatprep.subr.mxu0 0.0
        %353 = vmatpush2.xpose.msra.mxu0 0.0
        %354 = vmatprep.subr.mxu0 0.0
        %355 = vmatpush2.xpose.msra.mxu0 0.0
        %356 = vmatprep.subr.mxu0 0.0
        %357 = vmatpush2.xpose.msra.mxu0 0.0
        %358 = vmatprep.subr.mxu0 0.0
        %359 = vmatpush2.xpose.msra.mxu0 0.0
        %360 = vmatprep.subr.mxu0 0.0
        %361 = vmatpush2.xpose.msra.mxu0 0.0
        %362 = vmatprep.subr.mxu0 0.0
        %363 = vmatpush2.xpose.msra.mxu0 0.0
        %364 = vmatprep.subr.mxu0 0.0
        %365 = vmatpush2.xpose.msra.mxu0 0.0
        %366 = vmatprep.subr.mxu0 0.0
        %367 = vmatpush2.xpose.msra.mxu0 0.0
        %368 = vmatprep.mubr.f32.mxu0 %v237
        %369 = vmatmul.mubr.f32.gmra.mxu0 %v236
        %v370 = vpop.f32.mrf.mxu0
        %v371 = vadd.f32 0.0, %v370
        %v372 = vpop.f32.mrf.mxu0
        %373 = vdwg.mxu0
        %374 = vmatprep.subr.mxu0 %v303
        %375 = vmatpush1.xpose.msra.mxu0 %v302
        %376 = vmatprep.subr.mxu0 %v299
        %377 = vmatpush1.xpose.msra.mxu0 %v298
        %378 = vmatprep.subr.mxu0 %v295
        %379 = vmatpush1.xpose.msra.mxu0 %v294
        %380 = vmatprep.subr.mxu0 %v291
        %381 = vmatpush1.xpose.msra.mxu0 %v290
        %382 = vmatprep.subr.mxu0 %v287
        %383 = vmatpush1.xpose.msra.mxu0 %v286
        %384 = vmatprep.subr.mxu0 %v283
        %385 = vmatpush1.xpose.msra.mxu0 %v282
        %386 = vmatprep.subr.mxu0 %v279
        %387 = vmatpush1.xpose.msra.mxu0 %v278
        %388 = vmatprep.subr.mxu0 %v275
        %389 = vmatpush1.xpose.msra.mxu0 %v274
        %390 = vmatprep.subr.mxu0 %v271
        %391 = vmatpush1.xpose.msra.mxu0 %v270
        %392 = vmatprep.subr.mxu0 %v267
        %393 = vmatpush1.xpose.msra.mxu0 %v266
        %394 = vmatprep.subr.mxu0 %v263
        %395 = vmatpush1.xpose.msra.mxu0 %v262
        %396 = vmatprep.subr.mxu0 %v259
        %397 = vmatpush1.xpose.msra.mxu0 %v258
        %398 = vmatprep.subr.mxu0 %v255
        %399 = vmatpush1.xpose.msra.mxu0 %v254
        %400 = vmatprep.subr.mxu0 %v251
        %401 = vmatpush1.xpose.msra.mxu0 %v250
        %402 = vmatprep.subr.mxu0 %v247
        %403 = vmatpush1.xpose.msra.mxu0 %v246
        %404 = vmatprep.subr.mxu0 %v243
        %405 = vmatpush1.xpose.msra.mxu0 %v242
        %406 = vmatprep.subr.mxu0 0.0
        %407 = vmatpush2.xpose.msra.mxu0 0.0
        %408 = vmatprep.subr.mxu0 0.0
        %409 = vmatpush2.xpose.msra.mxu0 0.0
        %410 = vmatprep.subr.mxu0 0.0
        %411 = vmatpush2.xpose.msra.mxu0 0.0
        %412 = vmatprep.subr.mxu0 0.0
        %413 = vmatpush2.xpose.msra.mxu0 0.0
        %414 = vmatprep.subr.mxu0 0.0
        %415 = vmatpush2.xpose.msra.mxu0 0.0
        %416 = vmatprep.subr.mxu0 0.0
        %417 = vmatpush2.xpose.msra.mxu0 0.0
        %418 = vmatprep.subr.mxu0 0.0
        %419 = vmatpush2.xpose.msra.mxu0 0.0
        %420 = vmatprep.subr.mxu0 0.0
        %421 = vmatpush2.xpose.msra.mxu0 0.0
        %422 = vmatprep.subr.mxu0 0.0
        %423 = vmatpush2.xpose.msra.mxu0 0.0
        %424 = vmatprep.subr.mxu0 0.0
        %425 = vmatpush2.xpose.msra.mxu0 0.0
        %426 = vmatprep.subr.mxu0 0.0
        %427 = vmatpush2.xpose.msra.mxu0 0.0
        %428 = vmatprep.subr.mxu0 0.0
        %429 = vmatpush2.xpose.msra.mxu0 0.0
        %430 = vmatprep.subr.mxu0 0.0
        %431 = vmatpush2.xpose.msra.mxu0 0.0
        %432 = vmatprep.subr.mxu0 0.0
        %433 = vmatpush2.xpose.msra.mxu0 0.0
        %434 = vmatprep.subr.mxu0 0.0
        %435 = vmatpush2.xpose.msra.mxu0 0.0
        %436 = vmatprep.subr.mxu0 0.0
        %437 = vmatpush2.xpose.msra.mxu0 0.0
        %438 = vmatprep.mubr.f32.mxu0 %v239
        %439 = vmatmul.mubr.f32.gmra.mxu0 %v238
        %v440 = vpop.f32.mrf.mxu0
        %v441 = vadd.f32 %v371, %v440
        %v442 = vpop.f32.mrf.mxu0
        %443 = vdwg.mxu0
        %v444 = vadd.f32 %v235, %v441
        %445 = vst [vmem:[%s223] sm:$0xff] %v444
        %s446 = sand.u32 %s102, 1
        %s447 = scalar_lea.sflag [#allocation4], %s446
        %s448 = sand.u32 %s102, 1
        %s449 = smul.addr %s448, 8
        %s450 = scalar_lea.vmem [#allocation7], %s449
        // Predicated region
        $region41: #{tpu_custom_call.1} parent=27 // pred_check
          %p451 = pneg %p112
        $region42: #{tpu_custom_call.1} parent=27 // pred_check_branch
          %453 = sbr.rel (%p451) target = $region44
        $region43: #{tpu_custom_call.1} parent=27 // pred_region
          %s455 = ssub.s32 128, 128
          %456 = vsyncadd %s447, %s455
          %s457 = smul.addr %s26, 128
          %s458 = scalar_lea.hbm %s2, %s457
          %s460 = sshll.u32 %s450, 4
          %s461 = int_to_ptr.vmem [resolvable:$true] %s460
          %463 = dma.vmem_to_hbm [thread:$0]  %s461, 128, %s458, %s447
        $region44: #{tpu_custom_call.1} parent=27 // pred_fallthru
          _
      $region28: #{tpu_custom_call.1} parent=5 // pred_fallthru
        _
      %p464 = scmp.le.s32.totalorder 2, %s17
      // Predicated region
      $region45: #{tpu_custom_call.1} parent=5 // pred_check
        %p465 = pneg %p464
      $region46: #{tpu_custom_call.1} parent=5 // pred_check_branch
        %467 = sbr.rel (%p465) target = $region48
      $region47: #{tpu_custom_call.1} parent=5 // pred_region
        %s468 = ssub.s32 %s17, 2
        // Predicated region
        $region49: #{tpu_custom_call.1} parent=47 // pred_check
          %p469 = pneg %p118
        $region50: #{tpu_custom_call.1} parent=47 // pred_check_branch
          %471 = sbr.rel (%p469) target = $region52
        $region51: #{tpu_custom_call.1} parent=47 // pred_region
          %s472 = sand.u32 %s103, 1
          %s473 = scalar_lea.sflag [#allocation4], %s472
          %s474 = sand.u32 %s103, 1
          %s475 = smul.addr %s474, 8
          %s476 = scalar_lea.vmem [#allocation7], %s475
          %477 = dma.done %s473, 128
        $region52: #{tpu_custom_call.1} parent=47 // pred_fallthru
          _
      $region48: #{tpu_custom_call.1} parent=5 // pred_fallthru
        _
    $region6: #{tpu_custom_call.1} parent=1 // loop_footer
      %s21 = sadd.s32 1, %s17
    $region7: #{tpu_custom_call.1} parent=1 // loop_footer_branch
      %16 = sbr.rel target = $region3
    $region8: #{tpu_custom_call.1} parent=1 // loop_exit
      _
    %478 = vsyncpa [#allocation3], 1
    %s479 = scalar_lea.sflag [#allocation3], 1
    %480 = vsyncpa %s479, 1
    %481 = vsyncpa [#allocation6], 1
    %s482 = scalar_lea.sflag [#allocation6], 1
    %483 = vsyncpa %s482, 1
    %484 = vsyncpa [#allocation4], 1
    %s485 = scalar_lea.sflag [#allocation4], 1
    %486 = vsyncpa %s485, 1

</llo_original>
